<compile_context>
chip_gen: v6e
topology: v6e:2x2x1
jax: 0.10.0
libtpu: 0.0.40
codegen_flags: <defaults>
</compile_context>

<pallas_src>
import functools

import jax
import jax.numpy as jnp
from jax.experimental import pallas as pl
from jax.experimental.pallas import tpu as pltpu


def _gcn_block_kernel(*refs, n_out, kernel_size, dilation, t_tile, has_halo):
    """One (batch, time-tile) grid step.

    Refs (in order), with Cf = 2*Cout + Cout (conv rows then residual rows):
      x_cur  : (1, Cin, t_tile)   input tile starting at j*t_tile
      x_halo : (1, Cin, halo_w)   first lanes of the next tile (only if has_halo)
      wf     : (Cf, K*Cin)        fused weight: [dilated conv ; residual 1x1]
      bf     : (Cf, 1)            fused bias   (zeros on the residual rows)
      wmix   : (Cout, Cout)       1x1 mix conv weight
      bmix   : (Cout, 1)          1x1 mix conv bias
      out    : (1, Cout, t_tile)
      z      : (1, Cout, t_tile)
      xstack : (K*Cin, t_tile)    VMEM scratch: stacked tap-shifted windows
    """
    if has_halo:
        (x_cur_ref, x_nxt_ref, wf_ref, bf_ref, wmix_ref, bmix_ref,
         out_ref, z_ref, xstack_ref) = refs
    else:
        (x_cur_ref, wf_ref, bf_ref, wmix_ref, bmix_ref,
         out_ref, z_ref, xstack_ref) = refs
        x_nxt_ref = None

    cin = x_cur_ref.shape[1]

    # Stack the K tap-shifted windows along the contraction (sublane) axis.
    # Window k holds x[:, t + k*dilation]; lanes past the current tile come
    # from the first k*dilation lanes of the halo block (next tile of x).
    for k in range(kernel_size):
        o = k * dilation
        r0, r1 = k * cin, (k + 1) * cin
        if o == 0:
            xstack_ref[r0:r1, :] = x_cur_ref[0]
        else:
            xstack_ref[r0:r1, :t_tile - o] = x_cur_ref[0, :, o:]
            xstack_ref[r0:r1, t_tile - o:] = x_nxt_ref[0, :, :o]

    # Single fused MXU matmul: rows [0, 2*Cout) are the dilated causal conv,
    # rows [2*Cout, 3*Cout) are the causally-cropped residual 1x1 conv (its
    # weight only occupies the last-tap Cin columns of wf).
    acc = jnp.dot(wf_ref[...], xstack_ref[...],
                  preferred_element_type=jnp.float32) + bf_ref[...]
    conv = acc[:2 * n_out, :]
    res = acc[2 * n_out:, :]

    # Gated activation: tanh(first half) * sigmoid(second half).
    gated = jnp.tanh(conv[:n_out, :]) * jax.nn.sigmoid(conv[n_out:, :])
    z_ref[0] = gated.astype(z_ref.dtype)

    # 1x1 "mix" conv, then add the residual path.
    mix = jnp.dot(wmix_ref[...], gated,
                  preferred_element_type=jnp.float32) + bmix_ref[...]
    out_ref[0] = (mix + res).astype(out_ref.dtype)


def gcn_block(x, w1, b1, wmix, bmix, wres, *, kernel_size, dilation,
              t_tile=32768, out_dtype=None):
    """x: (B, Cin, T).  w1: (K, 2*Cout, Cin) tap-major.

    Returns (out, z), each (B, Cout, T_out), T_out = T - dilation*(K-1).
    Set out_dtype=jnp.bfloat16 to halve output HBM write traffic if the
    surrounding model tolerates it (math stays f32 in-kernel).
    """
    B, Cin, T = x.shape
    K, two_cout, _ = w1.shape
    assert K == kernel_size
    Cout = two_cout // 2
    receptive = dilation * (kernel_size - 1)
    T_out = T - receptive
    assert T_out >= 128, "tiled kernel needs at least 128 output samples"
    out_dtype = x.dtype if out_dtype is None else out_dtype
    has_halo = receptive > 0

    # Time tile: multiple of 128 lanes (and of the halo width so the halo
    # index map is an integral block index), <= requested size, >= receptive.
    halo_w = 128 * pl.cdiv(receptive, 128) if has_halo else 0
    tt = max(128, (min(int(t_tile), T_out) // 128) * 128)
    if has_halo:
        tt = max(halo_w, (tt // halo_w) * halo_w)
    assert tt > receptive, (
        f"t_tile ({tt}) must exceed the receptive field ({receptive})")
    n_t = pl.cdiv(T_out, tt)

    # v7x has two TensorCores: make sure there are >= 2 parallel grid steps
    # even at B == 1 by halving the tile if it would cover all of T_out.
    unit = max(128, halo_w)
    if B == 1 and n_t == 1 and tt >= 2 * unit:
        tt = max(unit, ((tt // 2) // unit) * unit)
        n_t = pl.cdiv(T_out, tt)

    # Right-pad x with zeros so every referenced input block (including the
    # final halo block) exists and is fully defined.
    T_in = n_t * tt + halo_w
    if T < T_in:
        x = jnp.pad(x, ((0, 0), (0, 0), (0, T_in - T)))

    # Fused weight: rows [0, 2*Cout) = dilated conv (tap-major columns),
    # rows [2*Cout, 3*Cout) = residual 1x1 conv, placed in the last-tap
    # columns (the causal crop offset equals the last tap's shift).
    w1_fused = jnp.transpose(w1, (1, 0, 2)).reshape(two_cout, K * Cin)
    wf = jnp.zeros((two_cout + Cout, K * Cin), w1.dtype)
    wf = wf.at[:two_cout, :].set(w1_fused)
    wf = wf.at[two_cout:, (K - 1) * Cin:].set(wres)
    bf = jnp.concatenate([b1, jnp.zeros((Cout, 1), b1.dtype)], axis=0)

    kernel = functools.partial(
        _gcn_block_kernel,
        n_out=Cout, kernel_size=kernel_size, dilation=dilation, t_tile=tt,
        has_halo=has_halo)

    const_map = lambda b, j: (0, 0)
    in_specs = [pl.BlockSpec((1, Cin, tt), lambda b, j: (b, 0, j))]
    args = [x]
    if has_halo:
        blocks_per_tile = tt // halo_w
        in_specs.append(
            pl.BlockSpec((1, Cin, halo_w),
                         lambda b, j: (b, 0, (j + 1) * blocks_per_tile)))
        args.append(x)
    in_specs += [
        pl.BlockSpec((two_cout + Cout, K * Cin), const_map),
        pl.BlockSpec((two_cout + Cout, 1), const_map),
        pl.BlockSpec((Cout, Cout), const_map),
        pl.BlockSpec((Cout, 1), const_map),
    ]
    args += [wf, bf, wmix, bmix]

    grid_spec = pltpu.PrefetchScalarGridSpec(
        num_scalar_prefetch=0,
        grid=(B, n_t),
        in_specs=in_specs,
        out_specs=[
            pl.BlockSpec((1, Cout, tt), lambda b, j: (b, 0, j)),
            pl.BlockSpec((1, Cout, tt), lambda b, j: (b, 0, j)),
        ],
        scratch_shapes=[pltpu.VMEM((K * Cin, tt), x.dtype)],
    )

    # VMEM footprint: double-buffered streaming blocks + resident weights +
    # scratch, with headroom for Mosaic internal scratch.  Clamp to 48 MiB so
    # the same tiling is safe on v7x (64 MiB physical VMEM) while exceeding
    # the 16/32 MiB scoped defaults on v5e/v6e.
    in_item = jnp.dtype(x.dtype).itemsize
    out_item = jnp.dtype(out_dtype).itemsize
    w_item = jnp.dtype(w1.dtype).itemsize
    w_bytes = (wf.size + bf.size + wmix.size + bmix.size) * w_item
    vmem_est = (2 * Cin * tt * in_item            # x_cur, double-buffered
                + 2 * Cin * halo_w * in_item      # halo, double-buffered
                + 2 * 2 * Cout * tt * out_item    # out + z, double-buffered
                + K * Cin * tt * in_item          # xstack scratch
                + 2 * w_bytes)                    # weight blocks
    vmem_limit = int(min(max(2 * vmem_est + (8 << 20), 32 << 20), 48 << 20))

    out, z = pl.pallas_call(
        kernel,
        out_shape=(
            jax.ShapeDtypeStruct((B, Cout, T_out), out_dtype),
            jax.ShapeDtypeStruct((B, Cout, T_out), out_dtype),
        ),
        grid_spec=grid_spec,
        compiler_params=pltpu.CompilerParams(
            dimension_semantics=("parallel", "parallel"),
            vmem_limit_bytes=vmem_limit),
    )(*args)
    return out, z


def gcn_block_ref(x, w1, b1, wmix, bmix, wres, *, kernel_size, dilation):
    """Pure-JAX reference matching the PyTorch forward."""
    B, Cin, T = x.shape
    K, two_cout, _ = w1.shape
    Cout = two_cout // 2
    T_out = T - dilation * (kernel_size - 1)

    y = jnp.zeros((B, two_cout, T_out), jnp.float32)
    for k in range(K):
        xk = x[:, :, k * dilation:k * dilation + T_out]
        y = y + jnp.einsum('oi,bit->bot', w1[k], xk)
    y = y + b1[None, :, :]
    z = jnp.tanh(y[:, :Cout, :]) * jax.nn.sigmoid(y[:, Cout:, :])
    mix = jnp.einsum('oi,bit->bot', wmix, z) + bmix[None, :, :]
    res = jnp.einsum('oi,bit->bot', wres, x[:, :, T - T_out:])
    return mix + res, z


def _run_case(name, key, *, B, Cin, Cout, T, kernel_size, dilation,
              t_tile=32768, out_dtype=None, atol=1e-5, rtol=1e-5):
    kx, kw1, kb1, kwm, kbm, kwr = jax.random.split(key, 6)
    x = jax.random.normal(kx, (B, Cin, T), dtype=jnp.float32)
    # Conv1d weight (out, in, K) stored tap-major (K, out, in).
    w1 = 0.3 * jax.random.normal(kw1, (kernel_size, 2 * Cout, Cin), jnp.float32)
    b1 = 0.1 * jax.random.normal(kb1, (2 * Cout, 1), jnp.float32)
    wmix = 0.3 * jax.random.normal(kwm, (Cout, Cout), jnp.float32)
    bmix = 0.1 * jax.random.normal(kbm, (Cout, 1), jnp.float32)
    wres = 0.3 * jax.random.normal(kwr, (Cout, Cin), jnp.float32)

    out, z = gcn_block(x, w1, b1, wmix, bmix, wres,
                       kernel_size=kernel_size, dilation=dilation,
                       t_tile=t_tile, out_dtype=out_dtype)
    jax.block_until_ready(out)
    jax.block_until_ready(z)

    out_ref, z_ref = gcn_block_ref(x, w1, b1, wmix, bmix, wres,
                                   kernel_size=kernel_size, dilation=dilation)
    assert out.shape == out_ref.shape and z.shape == z_ref.shape, name
    assert jnp.allclose(out.astype(jnp.float32), out_ref,
                        atol=atol, rtol=rtol), name
    assert jnp.allclose(z.astype(jnp.float32), z_ref,
                        atol=atol, rtol=rtol), name


if __name__ == "__main__":
    # GCNBlock(n_inp=4, n_output=4, n_cond=0, kernel_size=K, dilation=d,
    #          causal=True, filmed=False, hypered=False, bias=True)
    root = jax.random.PRNGKey(0)
    k0, k1, k2, k3, k4 = jax.random.split(root, 5)

    # Exact tiling: T_out = 512 -> two 256-lane time tiles + 128-lane halo.
    _run_case("exact", k0, B=2, Cin=4, Cout=4, T=516,
              kernel_size=3, dilation=2, t_tile=256)
    # Ragged last tile + halo padding: T_out = 692 -> three 256-lane tiles.
    _run_case("ragged", k1, B=2, Cin=4, Cout=4, T=700,
              kernel_size=3, dilation=4, t_tile=256)
    # Default (large) tile clamps to T_out, then halves at B==1 so the grid
    # still exposes two parallel time tiles (v7x dual-TensorCore path).
    _run_case("default_tile", k2, B=1, Cin=4, Cout=4, T=516,
              kernel_size=3, dilation=2)
    # kernel_size == 1: no halo operand at all, Cout != Cin.
    _run_case("k1_no_halo", k3, B=1, Cin=4, Cout=8, T=512,
              kernel_size=1, dilation=1, t_tile=256)
    # bf16 outputs (halves output HBM writes); math stays f32 in-kernel.
    _run_case("bf16_out", k4, B=2, Cin=4, Cout=4, T=516,
              kernel_size=3, dilation=2, t_tile=256,
              out_dtype=jnp.bfloat16, atol=5e-2, rtol=5e-2)

    print("KERNEL_OK")
</pallas_src>

<mosaic_0001>
module attributes {stable_mosaic.version = 11 : i64} {
  func.func @_gcn_block_kernel(%arg0: i32, %arg1: i32, %arg2: memref<1x4x256xf32, #tpu.memory_space<vmem>>, %arg3: memref<1x4x128xf32, #tpu.memory_space<vmem>>, %arg4: memref<12x12xf32, #tpu.memory_space<vmem>>, %arg5: memref<12x1xf32, #tpu.memory_space<vmem>>, %arg6: memref<4x4xf32, #tpu.memory_space<vmem>>, %arg7: memref<4x1xf32, #tpu.memory_space<vmem>>, %arg8: memref<1x4x256xf32, #tpu.memory_space<vmem>>, %arg9: memref<1x4x256xf32, #tpu.memory_space<vmem>>, %arg10: memref<12x256xf32, #tpu.memory_space<vmem>>) attributes {dimension_semantics = [#tpu.dimension_semantics<parallel>, #tpu.dimension_semantics<parallel>], iteration_bounds = array<i64: 2, 2>, scalar_prefetch = 0 : i64, scratch_operands = 1 : i64, tpu.core_type = #tpu.core_type<tc>, window_params = [{transform_indices = @transform_0, window_bounds = array<i64: 1, 4, 256>}, {transform_indices = @transform_1, window_bounds = array<i64: 1, 4, 128>}, {pipeline_mode = #tpu.pipeline_mode<synchronous>, transform_indices = @transform_2, window_bounds = array<i64: 12, 12>}, {pipeline_mode = #tpu.pipeline_mode<synchronous>, transform_indices = @transform_3, window_bounds = array<i64: 12, 1>}, {pipeline_mode = #tpu.pipeline_mode<synchronous>, transform_indices = @transform_4, window_bounds = array<i64: 4, 4>}, {pipeline_mode = #tpu.pipeline_mode<synchronous>, transform_indices = @transform_5, window_bounds = array<i64: 4, 1>}, {transform_indices = @transform_6, window_bounds = array<i64: 1, 4, 256>}, {transform_indices = @transform_7, window_bounds = array<i64: 1, 4, 256>}]} {
    %c0 = arith.constant 0 : index
    %c0_0 = arith.constant 0 : index
    %c0_1 = arith.constant 0 : index
    %0 = vector.load %arg2[%c0, %c0_0, %c0_1] : memref<1x4x256xf32, #tpu.memory_space<vmem>>, vector<1x4x256xf32>
    %1 = vector.shape_cast %0 : vector<1x4x256xf32> to vector<4x256xf32>
    %c0_2 = arith.constant 0 : index
    %c0_3 = arith.constant 0 : index
    %2 = vector.load %arg10[%c0_2, %c0_3] : memref<12x256xf32, #tpu.memory_space<vmem>>, vector<4x256xf32>
    tpu.vector_store %arg10[%c0_2, %c0_3], %1 {strides = array<i32>} : memref<12x256xf32, #tpu.memory_space<vmem>>, vector<4x256xf32>,
    %c0_4 = arith.constant 0 : index
    %c0_5 = arith.constant 0 : index
    %c2 = arith.constant 2 : index
    %3 = vector.load %arg2[%c0_4, %c0_5, %c2] : memref<1x4x256xf32, #tpu.memory_space<vmem>>, vector<1x4x254xf32>
    %4 = vector.shape_cast %3 : vector<1x4x254xf32> to vector<4x254xf32>
    %c4 = arith.constant 4 : index
    %c0_6 = arith.constant 0 : index
    %5 = vector.load %arg10[%c4, %c0_6] : memref<12x256xf32, #tpu.memory_space<vmem>>, vector<4x254xf32>
    tpu.vector_store %arg10[%c4, %c0_6], %4 {strides = array<i32>} : memref<12x256xf32, #tpu.memory_space<vmem>>, vector<4x254xf32>,
    %c0_7 = arith.constant 0 : index
    %c0_8 = arith.constant 0 : index
    %c0_9 = arith.constant 0 : index
    %6 = vector.load %arg3[%c0_7, %c0_8, %c0_9] : memref<1x4x128xf32, #tpu.memory_space<vmem>>, vector<1x4x2xf32>
    %7 = vector.shape_cast %6 : vector<1x4x2xf32> to vector<4x2xf32>
    %c4_10 = arith.constant 4 : index
    %c254 = arith.constant 254 : index
    %8 = vector.load %arg10[%c4_10, %c254] : memref<12x256xf32, #tpu.memory_space<vmem>>, vector<4x2xf32>
    tpu.vector_store %arg10[%c4_10, %c254], %7 {strides = array<i32>} : memref<12x256xf32, #tpu.memory_space<vmem>>, vector<4x2xf32>,
    %c0_11 = arith.constant 0 : index
    %c0_12 = arith.constant 0 : index
    %c4_13 = arith.constant 4 : index
    %9 = vector.load %arg2[%c0_11, %c0_12, %c4_13] : memref<1x4x256xf32, #tpu.memory_space<vmem>>, vector<1x4x252xf32>
    %10 = vector.shape_cast %9 : vector<1x4x252xf32> to vector<4x252xf32>
    %c8 = arith.constant 8 : index
    %c0_14 = arith.constant 0 : index
    %11 = vector.load %arg10[%c8, %c0_14] : memref<12x256xf32, #tpu.memory_space<vmem>>, vector<4x252xf32>
    tpu.vector_store %arg10[%c8, %c0_14], %10 {strides = array<i32>} : memref<12x256xf32, #tpu.memory_space<vmem>>, vector<4x252xf32>,
    %c0_15 = arith.constant 0 : index
    %c0_16 = arith.constant 0 : index
    %c0_17 = arith.constant 0 : index
    %12 = vector.load %arg3[%c0_15, %c0_16, %c0_17] : memref<1x4x128xf32, #tpu.memory_space<vmem>>, vector<1x4x4xf32>
    %13 = vector.shape_cast %12 : vector<1x4x4xf32> to vector<4x4xf32>
    %c8_18 = arith.constant 8 : index
    %c252 = arith.constant 252 : index
    %14 = vector.load %arg10[%c8_18, %c252] : memref<12x256xf32, #tpu.memory_space<vmem>>, vector<4x4xf32>
    tpu.vector_store %arg10[%c8_18, %c252], %13 {strides = array<i32>} : memref<12x256xf32, #tpu.memory_space<vmem>>, vector<4x4xf32>,
    %c0_19 = arith.constant 0 : index
    %c0_20 = arith.constant 0 : index
    %15 = vector.load %arg4[%c0_19, %c0_20] : memref<12x12xf32, #tpu.memory_space<vmem>>, vector<12x12xf32>
    %c0_21 = arith.constant 0 : index
    %c0_22 = arith.constant 0 : index
    %16 = vector.load %arg10[%c0_21, %c0_22] : memref<12x256xf32, #tpu.memory_space<vmem>>, vector<12x256xf32>
    %cst = arith.constant dense<0.000000e+00> : vector<12x256xf32>
    %17 = tpu.matmul %15, %16, %cst {dimension_numbers = #tpu.dot_dimension_numbers<[1], [0], [0], [1], [0, 0, 1, 1], [], []>} : vector<12x12xf32>, vector<12x256xf32>, vector<12x256xf32> -> vector<12x256xf32>
    %c0_23 = arith.constant 0 : index
    %c0_24 = arith.constant 0 : index
    %18 = vector.load %arg5[%c0_23, %c0_24] : memref<12x1xf32, #tpu.memory_space<vmem>>, vector<12x1xf32>
    %19 = vector.broadcast %18 : vector<12x1xf32> to vector<12x256xf32>
    %20 = arith.addf %17, %19 : vector<12x256xf32>
    %21 = vector.extract_strided_slice %20 {offsets = [0, 0], sizes = [8, 256], strides = [1, 1]} : vector<12x256xf32> to vector<8x256xf32>
    %22 = vector.extract_strided_slice %20 {offsets = [8, 0], sizes = [4, 256], strides = [1, 1]} : vector<12x256xf32> to vector<4x256xf32>
    %23 = vector.extract_strided_slice %21 {offsets = [0, 0], sizes = [4, 256], strides = [1, 1]} : vector<8x256xf32> to vector<4x256xf32>
    %24 = math.tanh %23 : vector<4x256xf32>
    %25 = vector.extract_strided_slice %21 {offsets = [4, 0], sizes = [4, 256], strides = [1, 1]} : vector<8x256xf32> to vector<4x256xf32>
    %26 = arith.negf %25 : vector<4x256xf32>
    %27 = math.exp %26 : vector<4x256xf32>
    %cst_25 = arith.constant 1.000000e+00 : f32
    %28 = vector.broadcast %cst_25 : f32 to vector<4x256xf32>
    %29 = arith.addf %28, %27 : vector<4x256xf32>
    %30 = arith.divf %28, %29 : vector<4x256xf32>
    %31 = arith.mulf %24, %30 : vector<4x256xf32>
    %c0_26 = arith.constant 0 : index
    %c0_27 = arith.constant 0 : index
    %c0_28 = arith.constant 0 : index
    %32 = vector.load %arg9[%c0_26, %c0_27, %c0_28] : memref<1x4x256xf32, #tpu.memory_space<vmem>>, vector<1x4x256xf32>
    %33 = vector.shape_cast %32 : vector<1x4x256xf32> to vector<4x256xf32>
    %34 = vector.shape_cast %31 : vector<4x256xf32> to vector<1x4x256xf32>
    tpu.vector_store %arg9[%c0_26, %c0_27, %c0_28], %34 {strides = array<i32>} : memref<1x4x256xf32, #tpu.memory_space<vmem>>, vector<1x4x256xf32>,
    %c0_29 = arith.constant 0 : index
    %c0_30 = arith.constant 0 : index
    %35 = vector.load %arg6[%c0_29, %c0_30] : memref<4x4xf32, #tpu.memory_space<vmem>>, vector<4x4xf32>
    %cst_31 = arith.constant dense<0.000000e+00> : vector<4x256xf32>
    %36 = tpu.matmul %35, %31, %cst_31 {dimension_numbers = #tpu.dot_dimension_numbers<[1], [0], [0], [1], [0, 0, 1, 1], [], []>} : vector<4x4xf32>, vector<4x256xf32>, vector<4x256xf32> -> vector<4x256xf32>
    %c0_32 = arith.constant 0 : index
    %c0_33 = arith.constant 0 : index
    %37 = vector.load %arg7[%c0_32, %c0_33] : memref<4x1xf32, #tpu.memory_space<vmem>>, vector<4x1xf32>
    %38 = vector.broadcast %37 : vector<4x1xf32> to vector<4x256xf32>
    %39 = arith.addf %36, %38 : vector<4x256xf32>
    %40 = arith.addf %39, %22 : vector<4x256xf32>
    %c0_34 = arith.constant 0 : index
    %c0_35 = arith.constant 0 : index
    %c0_36 = arith.constant 0 : index
    %41 = vector.load %arg8[%c0_34, %c0_35, %c0_36] : memref<1x4x256xf32, #tpu.memory_space<vmem>>, vector<1x4x256xf32>
    %42 = vector.shape_cast %41 : vector<1x4x256xf32> to vector<4x256xf32>
    %43 = vector.shape_cast %40 : vector<4x256xf32> to vector<1x4x256xf32>
    tpu.vector_store %arg8[%c0_34, %c0_35, %c0_36], %43 {strides = array<i32>} : memref<1x4x256xf32, #tpu.memory_space<vmem>>, vector<1x4x256xf32>,
    return
  }
  func.func @transform_0(%arg0: i32, %arg1: i32) -> (i32, i32, i32) {
    %c0_i32 = arith.constant 0 : i32
    %c0_i32_0 = arith.constant 0 : i32
    return %arg0, %c0_i32, %arg1 : i32, i32, i32
  }
  func.func @transform_1(%arg0: i32, %arg1: i32) -> (i32, i32, i32) {
    %c1_i32 = arith.constant 1 : i32
    %0 = arith.addi %arg1, %c1_i32 : i32
    %c2_i32 = arith.constant 2 : i32
    %1 = arith.muli %0, %c2_i32 : i32
    %c0_i32 = arith.constant 0 : i32
    %c0_i32_0 = arith.constant 0 : i32
    return %arg0, %c0_i32, %1 : i32, i32, i32
  }
  func.func @transform_2(%arg0: i32, %arg1: i32) -> (i32, i32) {
    %c0_i32 = arith.constant 0 : i32
    %c0_i32_0 = arith.constant 0 : i32
    %c0_i32_1 = arith.constant 0 : i32
    return %c0_i32, %c0_i32_0 : i32, i32
  }
  func.func @transform_3(%arg0: i32, %arg1: i32) -> (i32, i32) {
    %c0_i32 = arith.constant 0 : i32
    %c0_i32_0 = arith.constant 0 : i32
    %c0_i32_1 = arith.constant 0 : i32
    return %c0_i32, %c0_i32_0 : i32, i32
  }
  func.func @transform_4(%arg0: i32, %arg1: i32) -> (i32, i32) {
    %c0_i32 = arith.constant 0 : i32
    %c0_i32_0 = arith.constant 0 : i32
    %c0_i32_1 = arith.constant 0 : i32
    return %c0_i32, %c0_i32_0 : i32, i32
  }
  func.func @transform_5(%arg0: i32, %arg1: i32) -> (i32, i32) {
    %c0_i32 = arith.constant 0 : i32
    %c0_i32_0 = arith.constant 0 : i32
    %c0_i32_1 = arith.constant 0 : i32
    return %c0_i32, %c0_i32_0 : i32, i32
  }
  func.func @transform_6(%arg0: i32, %arg1: i32) -> (i32, i32, i32) {
    %c0_i32 = arith.constant 0 : i32
    %c0_i32_0 = arith.constant 0 : i32
    return %arg0, %c0_i32, %arg1 : i32, i32, i32
  }
  func.func @transform_7(%arg0: i32, %arg1: i32) -> (i32, i32, i32) {
    %c0_i32 = arith.constant 0 : i32
    %c0_i32_0 = arith.constant 0 : i32
    return %arg0, %c0_i32, %arg1 : i32, i32, i32
  }
}

</mosaic_0001>

<llo_original>
// kernel: tpu_custom_call.1
$region0: #{tpu_custom_call.1}
  #allocation0 [shape = 'u32[]', space=smem, size = 0x4, offset = 0x4, fixed_abs, tag = 'smem constant byte address 0x4 - core index']
  #allocation1 [shape = 'u32[144,128]{1,0:T(1,128)}', space=vmem, size = 0x12000, scoped, tag = 'internal scratch']
  #allocation2 [shape = 'f32[12,256]{1,0:T(8,128)}', space=vmem, size = 0x4000, scoped, tag = 'scratch operand']
  %s0 = inlined_call_operand.hbm [shape: f32[2,4,640], index: 0, kind: input, shape index: {}]
  %s1 = inlined_call_operand.hbm [shape: f32[2,4,640], index: 1, kind: input, shape index: {}]
  %s2 = inlined_call_operand.vmem [shape: f32[12,12], index: 2, kind: input, shape index: {}]
  %s3 = inlined_call_operand.vmem [shape: f32[12,1], index: 3, kind: input, shape index: {}]
  %s4 = inlined_call_operand.vmem [shape: f32[4,4], index: 4, kind: input, shape index: {}]
  %s5 = inlined_call_operand.vmem [shape: f32[4,1], index: 5, kind: input, shape index: {}]
  %s6 = inlined_call_operand.hbm [shape: f32[2,4,512], index: 6, kind: output, shape index: {0}]
  %s7 = inlined_call_operand.hbm [shape: f32[2,4,512], index: 7, kind: output, shape index: {1}]
  %8 = xla_tuple %s6, %s7
  %s9 = sld [smem:[#allocation0]]
  $region73: #{tpu_custom_call.1} parent=0
    _
  %s11 = ssub.s32 1, %s9
  %s12 = scalar_select 0, %s11, %s9
  $region1: #{tpu_custom_call.1} parent=0
    #allocation3 [shape = 'u8[8192]{0}', space=vmem, size = 0x2000, scoped, tag = 'input window, operand 0']
    #allocation4 [shape = 's32[2]{0}', space=sflag, size = 0x8, scoped, tag = 'scoped memory for tpu_custom_call.1']
    #allocation5 [shape = 's32[2]{0}', space=sflag, size = 0x8, scoped, tag = 'scoped memory for tpu_custom_call.1']
    #allocation6 [shape = 'u8[4096]{0}', space=vmem, size = 0x1000, scoped, tag = 'input window, operand 1']
    #allocation7 [shape = 's32[2]{0}', space=sflag, size = 0x8, scoped, tag = 'scoped memory for tpu_custom_call.1']
    #allocation8 [shape = 'u8[8192]{0}', space=vmem, size = 0x2000, scoped, tag = 'output window, operand 0']
    #allocation9 [shape = 'u8[8192]{0}', space=vmem, size = 0x2000, scoped, tag = 'output window, operand 1']
    #allocation10 [shape = 's32[2]{0}', space=sflag, size = 0x8, scoped, tag = 'scoped memory for tpu_custom_call.1']
    %13 = vsyncpa [#allocation4], 0
    %s14 = scalar_lea.sflag [#allocation4], 1
    %15 = vsyncpa %s14, 0
    %16 = vsyncpa [#allocation7], 0
    %s17 = scalar_lea.sflag [#allocation7], 1
    %18 = vsyncpa %s17, 0
    %19 = vsyncpa [#allocation5], 0
    %s20 = scalar_lea.sflag [#allocation5], 1
    %21 = vsyncpa %s20, 0
    %22 = vsyncpa [#allocation10], 0
    %s23 = scalar_lea.sflag [#allocation10], 1
    %24 = vsyncpa %s23, 0
    loop: start=0, step=1, limit=6
    $region2: #{tpu_custom_call.1} parent=1 // loop_pre_header
      _
    $region3: #{tpu_custom_call.1} parent=1 // loop_header
      %s26 = sphi 0, %s30
      %p27 = scmp.ge.s32.totalorder %s26, 6
      %s33 = sphi 0, %s45
      %s34 = sphi 0, %s41
      %s35 = sphi 0, %s33
      %s36 = sphi 0, %s34
      %s37 = sphi 0, %s35
      %s38 = sphi 0, %s36
      %s50 = sphi 0, %s52
      %s53 = sphi 0, %s50
      %s54 = sphi 0, %s53
      %s70 = sphi 0, %s54
      %s82 = sphi 0, %s84
      %s85 = sphi 0, %s82
      %s86 = sphi 0, %s85
      %s102 = sphi 0, %s86
      %s106 = sphi 0, %s106
      %s108 = sphi 0, %s106
      %s109 = sphi 0, %s108
      %s123 = sphi 0, %s109
      %s127 = sphi 0, %s127
      %s129 = sphi 0, %s127
      %s130 = sphi 0, %s129
      %s144 = sphi 0, %s130
      %s148 = sphi 0, %s148
      %s150 = sphi 0, %s148
      %s151 = sphi 0, %s150
      %s165 = sphi 0, %s151
      %s169 = sphi 0, %s169
      %s171 = sphi 0, %s169
      %s172 = sphi 0, %s171
      %s186 = sphi 0, %s172
      %s194 = sphi 0, %s196
      %s197 = sphi 0, %s194
      %s198 = sphi 0, %s197
      %s214 = sphi 0, %s198
      %s222 = sphi 0, %s224
      %s225 = sphi 0, %s222
      %s226 = sphi 0, %s225
      %s242 = sphi 0, %s226
    $region4: #{tpu_custom_call.1} parent=1 // loop_header_branch
      %29 = sbr.rel (%p27) target = $region8
    $region5: #{tpu_custom_call.1} parent=1 // loop_body
      %s31 = ssub.s32 %s26, 1
      %s32 = ssub.s32 %s26, 2
      %s39 = sadd.s32 1, %s34
      %p40 = scmp.ge.s32.totalorder %s39, 2
      %s41 = scalar_select %p40, 0, %s39
      %s42 = sadd.s32 1, %s33
      %s43 = scalar_select %p40, %s42, %s33
      %p44 = scmp.ge.s32.totalorder %s43, 2
      %s45 = scalar_select %p44, 0, %s43
      %s46 = ssub.s32 %s33, %s45
      %s47 = ssub.s32 %s34, %s41
      %s48 = sor.u32 %s46, %s47
      %p49 = scmp.eq.s32.totalorder %s48, 0
      %s51 = sadd.s32 %s50, 1
      %s52 = scalar_select %p49, %s50, %s51
      %p55 = pneg %p49
      %p56 = scmp.eq.s32.totalorder %s26, 3
      %p57 = por %p55, %p56
      %p58 = scmp.ne.s32.totalorder %s50, %s53
      %p59 = scmp.eq.s32.totalorder %s26, 0
      %p60 = por %p58, %p59
      %p61 = scmp.ne.s32.totalorder %s50, %s53
      %p62 = scmp.eq.s32.totalorder %s31, 3
      %p63 = por %p61, %p62
      %p64 = scmp.ne.s32.totalorder %s53, %s54
      %p65 = scmp.eq.s32.totalorder %s31, 0
      %p66 = por %p64, %p65
      %p67 = scmp.ne.s32.totalorder %s53, %s54
      %p68 = scmp.eq.s32.totalorder %s32, 3
      %p69 = por %p67, %p68
      %p71 = scmp.ne.s32.totalorder %s54, %s70
      %p72 = scmp.eq.s32.totalorder %s32, 0
      %p73 = por %p71, %p72
      %s74 = sadd.s32 %s34, 1
      %s75 = smul.u32 %s74, 2
      %s76 = sadd.s32 %s41, 1
      %s77 = smul.u32 %s76, 2
      %s78 = ssub.s32 %s33, %s45
      %s79 = ssub.s32 %s75, %s77
      %s80 = sor.u32 %s78, %s79
      %p81 = scmp.eq.s32.totalorder %s80, 0
      %s83 = sadd.s32 %s82, 1
      %s84 = scalar_select %p81, %s82, %s83
      %p87 = pneg %p81
      %p88 = scmp.eq.s32.totalorder %s26, 3
      %p89 = por %p87, %p88
      %p90 = scmp.ne.s32.totalorder %s82, %s85
      %p91 = scmp.eq.s32.totalorder %s26, 0
      %p92 = por %p90, %p91
      %p93 = scmp.ne.s32.totalorder %s82, %s85
      %p94 = scmp.eq.s32.totalorder %s31, 3
      %p95 = por %p93, %p94
      %p96 = scmp.ne.s32.totalorder %s85, %s86
      %p97 = scmp.eq.s32.totalorder %s31, 0
      %p98 = por %p96, %p97
      %p99 = scmp.ne.s32.totalorder %s85, %s86
      %p100 = scmp.eq.s32.totalorder %s32, 3
      %p101 = por %p99, %p100
      %p103 = scmp.ne.s32.totalorder %s86, %s102
      %p104 = scmp.eq.s32.totalorder %s32, 0
      %p105 = por %p103, %p104
      %s107 = sadd.s32 %s106, 1
      %p110 = scmp.eq.s32.totalorder %s26, 3
      %p111 = scmp.ne.s32.totalorder %s106, %s108
      %p112 = scmp.eq.s32.totalorder %s26, 0
      %p113 = por %p111, %p112
      %p114 = scmp.ne.s32.totalorder %s106, %s108
      %p115 = scmp.eq.s32.totalorder %s31, 3
      %p116 = por %p114, %p115
      %p117 = scmp.ne.s32.totalorder %s108, %s109
      %p118 = scmp.eq.s32.totalorder %s31, 0
      %p119 = por %p117, %p118
      %p120 = scmp.ne.s32.totalorder %s108, %s109
      %p121 = scmp.eq.s32.totalorder %s32, 3
      %p122 = por %p120, %p121
      %p124 = scmp.ne.s32.totalorder %s109, %s123
      %p125 = scmp.eq.s32.totalorder %s32, 0
      %p126 = por %p124, %p125
      %s128 = sadd.s32 %s127, 1
      %p131 = scmp.eq.s32.totalorder %s26, 3
      %p132 = scmp.ne.s32.totalorder %s127, %s129
      %p133 = scmp.eq.s32.totalorder %s26, 0
      %p134 = por %p132, %p133
      %p135 = scmp.ne.s32.totalorder %s127, %s129
      %p136 = scmp.eq.s32.totalorder %s31, 3
      %p137 = por %p135, %p136
      %p138 = scmp.ne.s32.totalorder %s129, %s130
      %p139 = scmp.eq.s32.totalorder %s31, 0
      %p140 = por %p138, %p139
      %p141 = scmp.ne.s32.totalorder %s129, %s130
      %p142 = scmp.eq.s32.totalorder %s32, 3
      %p143 = por %p141, %p142
      %p145 = scmp.ne.s32.totalorder %s130, %s144
      %p146 = scmp.eq.s32.totalorder %s32, 0
      %p147 = por %p145, %p146
      %s149 = sadd.s32 %s148, 1
      %p152 = scmp.eq.s32.totalorder %s26, 3
      %p153 = scmp.ne.s32.totalorder %s148, %s150
      %p154 = scmp.eq.s32.totalorder %s26, 0
      %p155 = por %p153, %p154
      %p156 = scmp.ne.s32.totalorder %s148, %s150
      %p157 = scmp.eq.s32.totalorder %s31, 3
      %p158 = por %p156, %p157
      %p159 = scmp.ne.s32.totalorder %s150, %s151
      %p160 = scmp.eq.s32.totalorder %s31, 0
      %p161 = por %p159, %p160
      %p162 = scmp.ne.s32.totalorder %s150, %s151
      %p163 = scmp.eq.s32.totalorder %s32, 3
      %p164 = por %p162, %p163
      %p166 = scmp.ne.s32.totalorder %s151, %s165
      %p167 = scmp.eq.s32.totalorder %s32, 0
      %p168 = por %p166, %p167
      %s170 = sadd.s32 %s169, 1
      %p173 = scmp.eq.s32.totalorder %s26, 3
      %p174 = scmp.ne.s32.totalorder %s169, %s171
      %p175 = scmp.eq.s32.totalorder %s26, 0
      %p176 = por %p174, %p175
      %p177 = scmp.ne.s32.totalorder %s169, %s171
      %p178 = scmp.eq.s32.totalorder %s31, 3
      %p179 = por %p177, %p178
      %p180 = scmp.ne.s32.totalorder %s171, %s172
      %p181 = scmp.eq.s32.totalorder %s31, 0
      %p182 = por %p180, %p181
      %p183 = scmp.ne.s32.totalorder %s171, %s172
      %p184 = scmp.eq.s32.totalorder %s32, 3
      %p185 = por %p183, %p184
      %p187 = scmp.ne.s32.totalorder %s172, %s186
      %p188 = scmp.eq.s32.totalorder %s32, 0
      %p189 = por %p187, %p188
      %s190 = ssub.s32 %s33, %s45
      %s191 = ssub.s32 %s34, %s41
      %s192 = sor.u32 %s190, %s191
      %p193 = scmp.eq.s32.totalorder %s192, 0
      %s195 = sadd.s32 %s194, 1
      %s196 = scalar_select %p193, %s194, %s195
      %p199 = pneg %p193
      %p200 = scmp.eq.s32.totalorder %s26, 3
      %p201 = por %p199, %p200
      %p202 = scmp.ne.s32.totalorder %s194, %s197
      %p203 = scmp.eq.s32.totalorder %s26, 0
      %p204 = por %p202, %p203
      %p205 = scmp.ne.s32.totalorder %s194, %s197
      %p206 = scmp.eq.s32.totalorder %s31, 3
      %p207 = por %p205, %p206
      %p208 = scmp.ne.s32.totalorder %s197, %s198
      %p209 = scmp.eq.s32.totalorder %s31, 0
      %p210 = por %p208, %p209
      %p211 = scmp.ne.s32.totalorder %s197, %s198
      %p212 = scmp.eq.s32.totalorder %s32, 3
      %p213 = por %p211, %p212
      %p215 = scmp.ne.s32.totalorder %s198, %s214
      %p216 = scmp.eq.s32.totalorder %s32, 0
      %p217 = por %p215, %p216
      %s218 = ssub.s32 %s33, %s45
      %s219 = ssub.s32 %s34, %s41
      %s220 = sor.u32 %s218, %s219
      %p221 = scmp.eq.s32.totalorder %s220, 0
      %s223 = sadd.s32 %s222, 1
      %s224 = scalar_select %p221, %s222, %s223
      %p227 = pneg %p221
      %p228 = scmp.eq.s32.totalorder %s26, 3
      %p229 = por %p227, %p228
      %p230 = scmp.ne.s32.totalorder %s222, %s225
      %p231 = scmp.eq.s32.totalorder %s26, 0
      %p232 = por %p230, %p231
      %p233 = scmp.ne.s32.totalorder %s222, %s225
      %p234 = scmp.eq.s32.totalorder %s31, 3
      %p235 = por %p233, %p234
      %p236 = scmp.ne.s32.totalorder %s225, %s226
      %p237 = scmp.eq.s32.totalorder %s31, 0
      %p238 = por %p236, %p237
      %p239 = scmp.ne.s32.totalorder %s225, %s226
      %p240 = scmp.eq.s32.totalorder %s32, 3
      %p241 = por %p239, %p240
      %p243 = scmp.ne.s32.totalorder %s226, %s242
      %p244 = scmp.eq.s32.totalorder %s32, 0
      %p245 = por %p243, %p244
      %p246 = scmp.le.s32.totalorder 1, %s26
      %p247 = scmp.lt.s32.totalorder %s26, 5
      %p248 = pnand %p246, %p247
      %p249 = pneg %p248
      // Predicated region
      $region9: #{tpu_custom_call.1} parent=5 // pred_check
        _
      $region10: #{tpu_custom_call.1} parent=5 // pred_check_branch
        %251 = sbr.rel (%p248) target = $region12
      $region11: #{tpu_custom_call.1} parent=5 // pred_region
        %s252 = ssub.s32 %s26, 1
        // Predicated region
        $region13: #{tpu_custom_call.1} parent=11 // pred_check
          %p253 = pneg %p119
        $region14: #{tpu_custom_call.1} parent=11 // pred_check_branch
          %255 = sbr.rel (%p253) target = $region16
        $region15: #{tpu_custom_call.1} parent=11 // pred_region
          _
        $region16: #{tpu_custom_call.1} parent=11 // pred_fallthru
          _
        // Predicated region
        $region17: #{tpu_custom_call.1} parent=11 // pred_check
          %p256 = pneg %p140
        $region18: #{tpu_custom_call.1} parent=11 // pred_check_branch
          %258 = sbr.rel (%p256) target = $region20
        $region19: #{tpu_custom_call.1} parent=11 // pred_region
          _
        $region20: #{tpu_custom_call.1} parent=11 // pred_fallthru
          _
        // Predicated region
        $region21: #{tpu_custom_call.1} parent=11 // pred_check
          %p259 = pneg %p161
        $region22: #{tpu_custom_call.1} parent=11 // pred_check_branch
          %261 = sbr.rel (%p259) target = $region24
        $region23: #{tpu_custom_call.1} parent=11 // pred_region
          _
        $region24: #{tpu_custom_call.1} parent=11 // pred_fallthru
          _
        // Predicated region
        $region25: #{tpu_custom_call.1} parent=11 // pred_check
          %p262 = pneg %p182
        $region26: #{tpu_custom_call.1} parent=11 // pred_check_branch
          %264 = sbr.rel (%p262) target = $region28
        $region27: #{tpu_custom_call.1} parent=11 // pred_region
          _
        $region28: #{tpu_custom_call.1} parent=11 // pred_fallthru
          _
      $region12: #{tpu_custom_call.1} parent=5 // pred_fallthru
        _
      %p265 = scmp.lt.s32.totalorder %s26, 4
      // Predicated region
      $region29: #{tpu_custom_call.1} parent=5 // pred_check
        %p266 = pneg %p265
      $region30: #{tpu_custom_call.1} parent=5 // pred_check_branch
        %268 = sbr.rel (%p266) target = $region32
      $region31: #{tpu_custom_call.1} parent=5 // pred_region
        // Predicated region
        $region33: #{tpu_custom_call.1} parent=31 // pred_check
          %p269 = pneg %p60
        $region34: #{tpu_custom_call.1} parent=31 // pred_check_branch
          %271 = sbr.rel (%p269) target = $region36
        $region35: #{tpu_custom_call.1} parent=31 // pred_region
          %s272 = sand.u32 %s50, 1
          %s273 = scalar_lea.sflag [#allocation4], %s272
          %s274 = sand.u32 %s50, 1
          %s275 = smul.addr %s274, 8
          %s276 = scalar_lea.vmem [#allocation3], %s275
          %s277 = smul.u32 2, %s34
          %s278 = ssub.s32 5, %s277
          %p279 = scmp.lt.s32.totalorder %s278, 2
          %s280 = scalar_select %p279, %s278, 2
          %s281 = smul.u32 64, %s280
          %s283 = ssub.s32 128, %s281
          %284 = vsyncadd %s273, %s283
          %p285 = scmp.ne.s32.totalorder 0, %s281
          %s286 = smul.addr %s33, 5
          %s287 = sadd.s32 %s277, %s286
          %s288 = smul.addr %s287, 64
          %s289 = scalar_lea.hbm %s0, %s288
          %s290 = smul.u32 %s280, 4
          %s291 = sshll.u32 %s290, 4
          %s292 = sshll.u32 %s276, 4
          %s293 = int_to_ptr.vmem [resolvable:$true] %s292
          %295 = dma.hbm_to_vmem [thread:$0]  (%p285), %s289, %s291, %s293, %s273
        $region36: #{tpu_custom_call.1} parent=31 // pred_fallthru
          _
        // Predicated region
        $region37: #{tpu_custom_call.1} parent=31 // pred_check
          %p296 = pneg %p92
        $region38: #{tpu_custom_call.1} parent=31 // pred_check_branch
          %298 = sbr.rel (%p296) target = $region40
        $region39: #{tpu_custom_call.1} parent=31 // pred_region
          %s299 = sand.u32 %s82, 1
          %s300 = scalar_lea.sflag [#allocation7], %s299
          %s301 = sand.u32 %s82, 1
          %s302 = smul.addr %s301, 4
          %s303 = scalar_lea.vmem [#allocation6], %s302
          %s304 = sadd.s32 %s34, 1
          %s305 = smul.u32 %s304, 2
          %s307 = ssub.s32 64, 64
          %308 = vsyncadd %s300, %s307
          %s309 = smul.addr %s33, 5
          %s310 = sadd.s32 %s305, %s309
          %s311 = smul.addr %s310, 64
          %s312 = scalar_lea.hbm %s1, %s311
          %s314 = sshll.u32 %s303, 4
          %s315 = int_to_ptr.vmem [resolvable:$true] %s314
          %317 = dma.hbm_to_vmem [thread:$0]  %s312, 64, %s315, %s300
        $region40: #{tpu_custom_call.1} parent=31 // pred_fallthru
          _
      $region32: #{tpu_custom_call.1} parent=5 // pred_fallthru
        _
      %p318 = scmp.le.s32.totalorder 1, %s26
      %p319 = scmp.lt.s32.totalorder %s26, 5
      %p320 = pnand %p318, %p319
      %p321 = pneg %p320
      // Predicated region
      $region41: #{tpu_custom_call.1} parent=5 // pred_check
        _
      $region42: #{tpu_custom_call.1} parent=5 // pred_check_branch
        %323 = sbr.rel (%p320) target = $region44
      $region43: #{tpu_custom_call.1} parent=5 // pred_region
        %s324 = ssub.s32 %s26, 1
        %s325 = sand.u32 %s53, 1
        %s326 = scalar_lea.sflag [#allocation4], %s325
        %s327 = sand.u32 %s53, 1
        %s328 = smul.addr %s327, 8
        %s329 = scalar_lea.vmem [#allocation3], %s328
        // Predicated region
        $region45: #{tpu_custom_call.1} parent=43 // pred_check
          %p330 = pneg %p66
        $region46: #{tpu_custom_call.1} parent=43 // pred_check_branch
          %332 = sbr.rel (%p330) target = $region48
        $region47: #{tpu_custom_call.1} parent=43 // pred_region
          %333 = dma.done %s326, 128
        $region48: #{tpu_custom_call.1} parent=43 // pred_fallthru
          _
        %s334 = sand.u32 %s85, 1
        %s335 = scalar_lea.sflag [#allocation7], %s334
        %s336 = sand.u32 %s85, 1
        %s337 = smul.addr %s336, 4
        %s338 = scalar_lea.vmem [#allocation6], %s337
        // Predicated region
        $region49: #{tpu_custom_call.1} parent=43 // pred_check
          %p339 = pneg %p98
        $region50: #{tpu_custom_call.1} parent=43 // pred_check_branch
          %341 = sbr.rel (%p339) target = $region52
        $region51: #{tpu_custom_call.1} parent=43 // pred_region
          %342 = dma.done %s335, 64
        $region52: #{tpu_custom_call.1} parent=43 // pred_fallthru
          _
        %s343 = sand.u32 %s53, 1
        %s344 = scalar_lea.sflag [#allocation4], %s343
        %s345 = sand.u32 %s53, 1
        %s346 = smul.addr %s345, 8
        %s347 = scalar_lea.vmem [#allocation3], %s346
        %p348 = pneg %p66
        %p349 = pneg %p63
        %s350 = sand.u32 %s85, 1
        %s351 = scalar_lea.sflag [#allocation7], %s350
        %s352 = sand.u32 %s85, 1
        %s353 = smul.addr %s352, 4
        %s354 = scalar_lea.vmem [#allocation6], %s353
        %p355 = pneg %p98
        %p356 = pneg %p95
        %p357 = pneg %p119
        %p358 = pneg %p116
        %p359 = pneg %p140
        %p360 = pneg %p137
        %p361 = pneg %p161
        %p362 = pneg %p158
        %p363 = pneg %p182
        %p364 = pneg %p179
        %p365 = pneg %p210
        %p366 = pneg %p207
        %s367 = sand.u32 %s197, 1
        %s368 = scalar_lea.sflag [#allocation5], %s367
        %s369 = sand.u32 %s197, 1
        %s370 = smul.addr %s369, 8
        %s371 = scalar_lea.vmem [#allocation8], %s370
        %p372 = pneg %p238
        %p373 = pneg %p235
        %s374 = sand.u32 %s225, 1
        %s375 = scalar_lea.sflag [#allocation10], %s374
        %s376 = sand.u32 %s225, 1
        %s377 = smul.addr %s376, 8
        %s378 = scalar_lea.vmem [#allocation9], %s377
        %s379 = smul.u32 2, %s36
        %s380 = ssub.s32 5, %s379
        %p381 = scmp.lt.s32.totalorder %s380, 2
        %s382 = scalar_select %p381, %s380, 2
        %s383 = smul.u32 64, %s382
        %s384 = sadd.s32 %s36, 1
        %s385 = smul.u32 %s384, 2
        %s386 = smul.u32 2, %s36
        %s387 = smul.u32 2, %s36
        %v388 = vld [vmem:[%s329] sm:$0xff]
        %v390 = vcombine.high %v388, %v388
        %392 = vst [vmem:[#allocation2] sm:$0xf] %v388
        %393 = vst [vmem:[#allocation2 + $0x8] sm:$0xf] %v390
        %v394 = vld [vmem:[%s329] sm:$0xff]
        %v396 = vcombine.low %v394, %v394
        %397 = vrot.lane.b32.xlu0 %v396, 126
        %v398 = vpop.permute.xlu0 %397
        %399 = vrot.lane.b32.xlu0 %v394, 126
        %v400 = vpop.permute.xlu0 %399
        %vm401 = vcmask 1031168
        %v402 = vsel %vm401, %v398, %v400
        %405 = vst [vmem:[#allocation2] sm:$0xf0] %v402
        %vm406 = vcmask 1031172
        %407 = vst.msk [vmem:[#allocation2 + $0x8] sm:$0xf0] %vm406, %v400
        %v408 = vld [vmem:[%s338] sm:$0xf]
        %v410 = vrot.slane %v408, 4
        %411 = vrot.lane.b32.xlu0 %v410, 126
        %v412 = vpop.permute.xlu0 %411
        %vm414 = vcmask 1048564
        %415 = vst.msk [vmem:[#allocation2 + $0x8] sm:$0xf0] %vm414, %v412
        %v416 = vld [vmem:[%s329] sm:$0xff]
        %v418 = vcombine.high %v416, %v416
        %419 = vrot.lane.b32.xlu0 %v416, 124
        %v420 = vpop.permute.xlu0 %419
        %421 = vrot.lane.b32.xlu0 %v418, 124
        %v422 = vpop.permute.xlu0 %421
        %vm423 = vcmask 1014784
        %v424 = vsel %vm423, %v420, %v422
        %427 = vst [vmem:[#allocation2 + $0x10] sm:$0xf] %v424
        %vm428 = vcmask 1010688
        %429 = vst.msk [vmem:[#allocation2 + $0x18] sm:$0xf] %vm428, %v422
        %v430 = vld [vmem:[%s338] sm:$0xf]
        %432 = vrot.lane.b32.xlu0 %v430, 124
        %v433 = vpop.permute.xlu0 %432
        %vm435 = vcmask 1044448
        %436 = vst.msk [vmem:[#allocation2 + $0x18] sm:$0xf] %vm435, %v433
        %v437 = vld [vmem:[%s2] sm:$0xff]
        %v438 = vld [vmem:[%s2 + $0x8] sm:$0xf]
        %v439 = vld [vmem:[#allocation2] sm:$0xff]
        %v440 = vld [vmem:[#allocation2 + $0x8] sm:$0xff]
        %v441 = vld [vmem:[#allocation2 + $0x10] sm:$0xf]
        %v442 = vld [vmem:[#allocation2 + $0x18] sm:$0xf]
        %v443 = vld [vmem:[%s3] sm:$0xff]
        %v444 = vld [vmem:[%s3 + $0x8] sm:$0xf]
        %446 = vset.pattern.permute.xlu0 0
        %447 = vperm.xlu0 %446, %v443
        %v448 = vpop.permute.xlu0 %447
        %451 = vset.pattern.permute.xlu0 0
        %452 = vperm.xlu0 %451, %v444
        %v453 = vpop.permute.xlu0 %452
        %vm455 = vcmask 97280
        %v457 = vsel %vm455, %v437, 0
        %v460 = vsel %vm455, %v438, 0
        %vm462 = vcmask 1043456
        %v464 = vsel %vm462, %v441, 0
        %v467 = vsel %vm462, %v442, 0
        %469 = vmatprep.subr.mxu0 0.0
        %470 = vmatpush1.msra.mxu0 0.0
        %471 = vmatprep.subr.mxu0 0.0
        %472 = vmatpush1.msra.mxu0 0.0
        %473 = vmatprep.subr.mxu0 0.0
        %474 = vmatpush1.msra.mxu0 0.0
        %475 = vmatprep.subr.mxu0 0.0
        %476 = vmatpush1.msra.mxu0 0.0
        %477 = vmatprep.subr.mxu0 0.0
        %478 = vmatpush1.msra.mxu0 0.0
        %479 = vmatprep.subr.mxu0 0.0
        %480 = vmatpush1.msra.mxu0 0.0
        %481 = vmatprep.subr.mxu0 0.0
        %482 = vmatpush1.msra.mxu0 0.0
        %483 = vmatprep.subr.mxu0 0.0
        %484 = vmatpush1.msra.mxu0 0.0
        %485 = vmatprep.subr.mxu0 0.0
        %486 = vmatpush1.msra.mxu0 0.0
        %487 = vmatprep.subr.mxu0 0.0
        %488 = vmatpush1.msra.mxu0 0.0
        %489 = vmatprep.subr.mxu0 0.0
        %490 = vmatpush1.msra.mxu0 0.0
        %491 = vmatprep.subr.mxu0 0.0
        %492 = vmatpush1.msra.mxu0 0.0
        %493 = vmatprep.subr.mxu0 0.0
        %494 = vmatpush1.msra.mxu0 0.0
        %495 = vmatprep.subr.mxu0 0.0
        %496 = vmatpush1.msra.mxu0 0.0
        %497 = vmatprep.subr.mxu0 %v467
        %498 = vmatpush1.msra.mxu0 %v464
        %499 = vmatprep.subr.mxu0 %v440
        %500 = vmatpush1.msra.mxu0 %v439
        %501 = vmatprep.subr.mxu0 0.0
        %502 = vmatpush2.msra.mxu0 0.0
        %503 = vmatprep.subr.mxu0 0.0
        %504 = vmatpush2.msra.mxu0 0.0
        %505 = vmatprep.subr.mxu0 0.0
        %506 = vmatpush2.msra.mxu0 0.0
        %507 = vmatprep.subr.mxu0 0.0
        %508 = vmatpush2.msra.mxu0 0.0
        %509 = vmatprep.subr.mxu0 0.0
        %510 = vmatpush2.msra.mxu0 0.0
        %511 = vmatprep.subr.mxu0 0.0
        %512 = vmatpush2.msra.mxu0 0.0
        %513 = vmatprep.subr.mxu0 0.0
        %514 = vmatpush2.msra.mxu0 0.0
        %515 = vmatprep.subr.mxu0 0.0
        %516 = vmatpush2.msra.mxu0 0.0
        %517 = vmatprep.subr.mxu0 0.0
        %518 = vmatpush2.msra.mxu0 0.0
        %519 = vmatprep.subr.mxu0 0.0
        %520 = vmatpush2.msra.mxu0 0.0
        %521 = vmatprep.subr.mxu0 0.0
        %522 = vmatpush2.msra.mxu0 0.0
        %523 = vmatprep.subr.mxu0 0.0
        %524 = vmatpush2.msra.mxu0 0.0
        %525 = vmatprep.subr.mxu0 0.0
        %526 = vmatpush2.msra.mxu0 0.0
        %527 = vmatprep.subr.mxu0 0.0
        %528 = vmatpush2.msra.mxu0 0.0
        %529 = vmatprep.subr.mxu0 0.0
        %530 = vmatpush2.msra.mxu0 0.0
        %531 = vmatprep.subr.mxu0 0.0
        %532 = vmatpush2.msra.mxu0 0.0
        %533 = vmatprep.mubr.f32.mxu0 0.0
        %534 = vmatmul.mubr.f32.gmra.mxu0 %v457
        %v535 = vpop.f32.mrf.mxu0
        %v536 = vadd.f32 %v448, %v535
        %v537 = vpop.f32.mrf.mxu0
        %v538 = vadd.f32 %v448, %v537
        %539 = vmatprep.mubr.f32.mxu0 0.0
        %540 = vmatmul.mubr.f32.gmra.mxu0 %v460
        %v541 = vpop.f32.mrf.mxu0
        %v542 = vadd.f32 %v453, %v541
        %v543 = vpop.f32.mrf.mxu0
        %v544 = vadd.f32 %v453, %v543
        %545 = vdwg.mxu0
        %v546 = vtanh.pop %v536
        %v547 = vtanh.pop %v538
        %v548 = vxor.u32 %v536, 2147483648
        %v549 = vxor.u32 %v538, 2147483648
        %v550 = vmul.f32 %v548, 1.442695
        %v551 = vpow.pop %v550
        %v552 = vmul.f32 %v549, 1.442695
        %v553 = vpow.pop %v552
        %v554 = vadd.f32 %v551, 1.0
        %v555 = vadd.f32 %v553, 1.0
        %v556 = vrcp.pop %v554
        %v557 = vmul.f32 1.0, %v556
        %v558 = vrcp.pop %v555
        %v559 = vmul.f32 1.0, %v558
        %v562 = vrot.slane %v557, 4
        %v563 = vrot.slane %v559, 4
        %v566 = vmul.f32 %v546, %v562
        %v567 = vmul.f32 %v547, %v563
        %v570 = vcombine.low %v566, %v567
        %572 = vst [vmem:[%s378] sm:$0xff] %v570
        %v573 = vld [vmem:[%s4] sm:$0xf]
        %v574 = vld [vmem:[%s5] sm:$0xf]
        %576 = vset.pattern.permute.xlu0 0
        %577 = vperm.xlu0 %576, %v574
        %v578 = vpop.permute.xlu0 %577
        %vm580 = vcmask 31744
        %v582 = vsel %vm580, %v573, 0
        %v584 = vsel %vm462, %v566, 0
        %v586 = vsel %vm462, %v567, 0
        %588 = vmatprep.subr.mxu0 0.0
        %589 = vmatpush1.msra.mxu0 0.0
        %590 = vmatprep.subr.mxu0 0.0
        %591 = vmatpush1.msra.mxu0 0.0
        %592 = vmatprep.subr.mxu0 0.0
        %593 = vmatpush1.msra.mxu0 0.0
        %594 = vmatprep.subr.mxu0 0.0
        %595 = vmatpush1.msra.mxu0 0.0
        %596 = vmatprep.subr.mxu0 0.0
        %597 = vmatpush1.msra.mxu0 0.0
        %598 = vmatprep.subr.mxu0 0.0
        %599 = vmatpush1.msra.mxu0 0.0
        %600 = vmatprep.subr.mxu0 0.0
        %601 = vmatpush1.msra.mxu0 0.0
        %602 = vmatprep.subr.mxu0 0.0
        %603 = vmatpush1.msra.mxu0 0.0
        %604 = vmatprep.subr.mxu0 0.0
        %605 = vmatpush1.msra.mxu0 0.0
        %606 = vmatprep.subr.mxu0 0.0
        %607 = vmatpush1.msra.mxu0 0.0
        %608 = vmatprep.subr.mxu0 0.0
        %609 = vmatpush1.msra.mxu0 0.0
        %610 = vmatprep.subr.mxu0 0.0
        %611 = vmatpush1.msra.mxu0 0.0
        %612 = vmatprep.subr.mxu0 0.0
        %613 = vmatpush1.msra.mxu0 0.0
        %614 = vmatprep.subr.mxu0 0.0
        %615 = vmatpush1.msra.mxu0 0.0
        %616 = vmatprep.subr.mxu0 0.0
        %617 = vmatpush1.msra.mxu0 0.0
        %618 = vmatprep.subr.mxu0 %v586
        %619 = vmatpush1.msra.mxu0 %v584
        %620 = vmatprep.subr.mxu0 0.0
        %621 = vmatpush2.msra.mxu0 0.0
        %622 = vmatprep.subr.mxu0 0.0
        %623 = vmatpush2.msra.mxu0 0.0
        %624 = vmatprep.subr.mxu0 0.0
        %625 = vmatpush2.msra.mxu0 0.0
        %626 = vmatprep.subr.mxu0 0.0
        %627 = vmatpush2.msra.mxu0 0.0
        %628 = vmatprep.subr.mxu0 0.0
        %629 = vmatpush2.msra.mxu0 0.0
        %630 = vmatprep.subr.mxu0 0.0
        %631 = vmatpush2.msra.mxu0 0.0
        %632 = vmatprep.subr.mxu0 0.0
        %633 = vmatpush2.msra.mxu0 0.0
        %634 = vmatprep.subr.mxu0 0.0
        %635 = vmatpush2.msra.mxu0 0.0
        %636 = vmatprep.subr.mxu0 0.0
        %637 = vmatpush2.msra.mxu0 0.0
        %638 = vmatprep.subr.mxu0 0.0
        %639 = vmatpush2.msra.mxu0 0.0
        %640 = vmatprep.subr.mxu0 0.0
        %641 = vmatpush2.msra.mxu0 0.0
        %642 = vmatprep.subr.mxu0 0.0
        %643 = vmatpush2.msra.mxu0 0.0
        %644 = vmatprep.subr.mxu0 0.0
        %645 = vmatpush2.msra.mxu0 0.0
        %646 = vmatprep.subr.mxu0 0.0
        %647 = vmatpush2.msra.mxu0 0.0
        %648 = vmatprep.subr.mxu0 0.0
        %649 = vmatpush2.msra.mxu0 0.0
        %650 = vmatprep.subr.mxu0 0.0
        %651 = vmatpush2.msra.mxu0 0.0
        %652 = vmatprep.mubr.f32.mxu0 0.0
        %653 = vmatmul.mubr.f32.gmra.mxu0 %v582
        %v654 = vpop.f32.mrf.mxu0
        %v655 = vadd.f32 %v578, %v654
        %v656 = vpop.f32.mrf.mxu0
        %v657 = vadd.f32 %v578, %v656
        %658 = vdwg.mxu0
        %v659 = vadd.f32 %v655, %v542
        %v660 = vadd.f32 %v657, %v544
        %v663 = vcombine.low %v659, %v660
        %665 = vst [vmem:[%s371] sm:$0xff] %v663
        %s666 = sand.u32 %s197, 1
        %s667 = scalar_lea.sflag [#allocation5], %s666
        %s668 = sand.u32 %s197, 1
        %s669 = smul.addr %s668, 8
        %s670 = scalar_lea.vmem [#allocation8], %s669
        %s671 = sand.u32 %s225, 1
        %s672 = scalar_lea.sflag [#allocation10], %s671
        %s673 = sand.u32 %s225, 1
        %s674 = smul.addr %s673, 8
        %s675 = scalar_lea.vmem [#allocation9], %s674
        // Predicated region
        $region53: #{tpu_custom_call.1} parent=43 // pred_check
          %p676 = pneg %p207
        $region54: #{tpu_custom_call.1} parent=43 // pred_check_branch
          %678 = sbr.rel (%p676) target = $region56
        $region55: #{tpu_custom_call.1} parent=43 // pred_region
          %s679 = smul.u32 2, %s36
          %s681 = ssub.s32 128, 128
          %682 = vsyncadd %s667, %s681
          %s683 = smul.addr %s35, 4
          %s684 = sadd.s32 %s679, %s683
          %s685 = smul.addr %s684, 64
          %s686 = scalar_lea.hbm %s6, %s685
          %s688 = sshll.u32 %s670, 4
          %s689 = int_to_ptr.vmem [resolvable:$true] %s688
          %691 = dma.vmem_to_hbm [thread:$0]  %s689, 128, %s686, %s667
        $region56: #{tpu_custom_call.1} parent=43 // pred_fallthru
          _
        // Predicated region
        $region57: #{tpu_custom_call.1} parent=43 // pred_check
          %p692 = pneg %p235
        $region58: #{tpu_custom_call.1} parent=43 // pred_check_branch
          %694 = sbr.rel (%p692) target = $region60
        $region59: #{tpu_custom_call.1} parent=43 // pred_region
          %s695 = smul.u32 2, %s36
          %s697 = ssub.s32 128, 128
          %698 = vsyncadd %s672, %s697
          %s699 = smul.addr %s35, 4
          %s700 = sadd.s32 %s695, %s699
          %s701 = smul.addr %s700, 64
          %s702 = scalar_lea.hbm %s7, %s701
          %s704 = sshll.u32 %s675, 4
          %s705 = int_to_ptr.vmem [resolvable:$true] %s704
          %707 = dma.vmem_to_hbm [thread:$0]  %s705, 128, %s702, %s672
        $region60: #{tpu_custom_call.1} parent=43 // pred_fallthru
          _
      $region44: #{tpu_custom_call.1} parent=5 // pred_fallthru
        _
      %p708 = scmp.le.s32.totalorder 2, %s26
      // Predicated region
      $region61: #{tpu_custom_call.1} parent=5 // pred_check
        %p709 = pneg %p708
      $region62: #{tpu_custom_call.1} parent=5 // pred_check_branch
        %711 = sbr.rel (%p709) target = $region64
      $region63: #{tpu_custom_call.1} parent=5 // pred_region
        %s712 = ssub.s32 %s26, 2
        // Predicated region
        $region65: #{tpu_custom_call.1} parent=63 // pred_check
          %p713 = pneg %p213
        $region66: #{tpu_custom_call.1} parent=63 // pred_check_branch
          %715 = sbr.rel (%p713) target = $region68
        $region67: #{tpu_custom_call.1} parent=63 // pred_region
          %s716 = sand.u32 %s198, 1
          %s717 = scalar_lea.sflag [#allocation5], %s716
          %s718 = sand.u32 %s198, 1
          %s719 = smul.addr %s718, 8
          %s720 = scalar_lea.vmem [#allocation8], %s719
          %721 = dma.done %s717, 128
        $region68: #{tpu_custom_call.1} parent=63 // pred_fallthru
          _
        // Predicated region
        $region69: #{tpu_custom_call.1} parent=63 // pred_check
          %p722 = pneg %p241
        $region70: #{tpu_custom_call.1} parent=63 // pred_check_branch
          %724 = sbr.rel (%p722) target = $region72
        $region71: #{tpu_custom_call.1} parent=63 // pred_region
          %s725 = sand.u32 %s226, 1
          %s726 = scalar_lea.sflag [#allocation10], %s725
          %s727 = sand.u32 %s226, 1
          %s728 = smul.addr %s727, 8
          %s729 = scalar_lea.vmem [#allocation9], %s728
          %730 = dma.done %s726, 128
        $region72: #{tpu_custom_call.1} parent=63 // pred_fallthru
          _
      $region64: #{tpu_custom_call.1} parent=5 // pred_fallthru
        _
    $region6: #{tpu_custom_call.1} parent=1 // loop_footer
      %s30 = sadd.s32 1, %s26
    $region7: #{tpu_custom_call.1} parent=1 // loop_footer_branch
      %25 = sbr.rel target = $region3
    $region8: #{tpu_custom_call.1} parent=1 // loop_exit
      _
    %731 = vsyncpa [#allocation4], 1
    %s732 = scalar_lea.sflag [#allocation4], 1
    %733 = vsyncpa %s732, 1
    %734 = vsyncpa [#allocation7], 1
    %s735 = scalar_lea.sflag [#allocation7], 1
    %736 = vsyncpa %s735, 1
    %737 = vsyncpa [#allocation5], 1
    %s738 = scalar_lea.sflag [#allocation5], 1
    %739 = vsyncpa %s738, 1
    %740 = vsyncpa [#allocation10], 1
    %s741 = scalar_lea.sflag [#allocation10], 1
    %742 = vsyncpa %s741, 1

</llo_original>
